<compile_context>
chip_gen: v5e
topology: v5e:2x2
jax: 0.10.0
libtpu: 0.0.40
codegen_flags: <defaults>
</compile_context>

<pallas_src>
import jax
import jax.numpy as jnp
from jax import lax
from jax.experimental import pallas as pl
from jax.experimental.pallas import tpu as pltpu

LN_EPS = 1e-5  # torch.nn.LayerNorm default


def _round_up(n, m):
    return (n + m - 1) // m * m


def _pooler_kernel(cls_ref, gamma_ref, beta_ref, w_ref, b_ref, o_ref):
    # cls_ref:   [TB, H]   CLS-token rows for this batch tile (native dtype)
    # gamma_ref: [1, H]    LayerNorm scale (f32)
    # beta_ref:  [1, H]    LayerNorm shift (f32)
    # w_ref:     [H, Op]   Linear weight, pre-transposed, MXU compute dtype
    # b_ref:     [1, Op]   Linear bias (lane-padded, f32)
    # o_ref:     [TB, Op]  output tile
    x = cls_ref[...].astype(jnp.float32)

    # Two-pass LayerNorm statistics (torch-equivalent, numerically robust).
    mean = jnp.mean(x, axis=-1, keepdims=True)
    centered = x - mean
    var = jnp.mean(centered * centered, axis=-1, keepdims=True)
    inv_std = lax.rsqrt(var + LN_EPS)
    normed = centered * inv_std * gamma_ref[...] + beta_ref[...]

    # MXU matmul: weight stays in its prepared (bf16) dtype, activation operand
    # is cast to match, accumulation in f32.  [TB,H] @ [H,Op] -> [TB,Op]; the
    # weight is already [in, out] so no transpose/relayout is needed per step.
    w = w_ref[...]
    y = jnp.dot(normed.astype(w.dtype), w, preferred_element_type=jnp.float32)
    y = y + b_ref[...]
    o_ref[...] = jnp.tanh(y).astype(o_ref.dtype)


def prepare_pooler_params(gamma, beta, weight, bias, *, compute_dtype=jnp.bfloat16):
    """One-time parameter preparation, hoisted out of the forward hot path.

    - pads the output dim to a multiple of 128 (lane-dense output stores),
    - transposes the torch-layout [O, H] weight to [H, O_p],
    - casts the weight to the MXU compute dtype (bf16 by default).
    """
    H = gamma.shape[0]
    O = weight.shape[0]
    O_p = _round_up(O, 128)
    w = weight
    b = bias
    if O_p != O:
        w = jnp.pad(w, ((0, O_p - O), (0, 0)))
        b = jnp.pad(b, (0, O_p - O))
    return dict(
        gamma=gamma.reshape(1, H).astype(jnp.float32),
        beta=beta.reshape(1, H).astype(jnp.float32),
        w_t=jnp.asarray(w.T, dtype=compute_dtype),   # [H, O_p]
        bias=b.reshape(1, O_p).astype(jnp.float32),
        out_features=O,
    )


def pooler_forward_prepared(x, params, *, tile_b=None):
    """x: [B, S, H]; params from prepare_pooler_params. Returns [B, O]."""
    B, S, H = x.shape
    w_t = params["w_t"]
    gamma2 = params["gamma"]
    beta2 = params["beta"]
    bias2 = params["bias"]
    O = params["out_features"]
    assert w_t.shape[0] == H, (w_t.shape, H)
    O_p = w_t.shape[1]

    # ---- batch tiling: aim for >= 4 grid steps (>= 2 for megacore on v7x),
    # tiles a multiple of 8 sublanes; cap at 256 rows (fits v7x's 64 MiB VMEM
    # comfortably; on v5e/v6e with 128 MiB a larger tile_b may be passed in).
    if tile_b is None:
        if B <= 8:
            tile_b = B
        else:
            tile_b = min(256, _round_up(pl.cdiv(B, 4), 8))
    if tile_b < B:
        tile_b = max(8, _round_up(tile_b, 8))      # sublane-legal partial tiles
    else:
        tile_b = B                                 # full-dim block is always legal
    nb = pl.cdiv(B, tile_b)

    # ---- CLS-token gather: fuse into the input BlockSpec when H is
    # lane-aligned (strided DMA picks row 0 of every sequence from HBM).
    if H % 128 == 0 or S == 1:
        cls_src = x.reshape(B, S * H)   # free view; column-block 0 == x[:, 0, :]
    else:
        cls_src = x[:, 0, :]            # fallback XLA slice for lane-unaligned H

    x_bytes = jnp.dtype(x.dtype).itemsize
    w_bytes = jnp.dtype(w_t.dtype).itemsize
    cost = pl.CostEstimate(
        flops=2 * B * H * O_p + 10 * B * H,
        transcendentals=B * O_p + B,
        bytes_accessed=(B * H + B * O_p) * x_bytes
        + H * O_p * w_bytes
        + (2 * H + O_p) * 4,
    )

    def _run(single_buffer_invariants):
        inv_kw = (
            dict(pipeline_mode=pl.Buffered(1)) if single_buffer_invariants else {}
        )
        return pl.pallas_call(
            _pooler_kernel,
            out_shape=jax.ShapeDtypeStruct((B, O_p), x.dtype),
            grid=(nb,),
            in_specs=[
                pl.BlockSpec((tile_b, H), lambda i: (i, 0)),            # CLS rows, batch-tiled
                pl.BlockSpec((1, H), lambda i: (0, 0), **inv_kw),       # gamma  (VMEM-resident)
                pl.BlockSpec((1, H), lambda i: (0, 0), **inv_kw),       # beta   (VMEM-resident)
                pl.BlockSpec((H, O_p), lambda i: (0, 0), **inv_kw),     # weight (VMEM-resident)
                pl.BlockSpec((1, O_p), lambda i: (0, 0), **inv_kw),     # bias   (VMEM-resident)
            ],
            out_specs=pl.BlockSpec((tile_b, O_p), lambda i: (i, 0)),
            compiler_params=pltpu.CompilerParams(
                dimension_semantics=("parallel",),    # batch tiles across TCs (v7x)
                vmem_limit_bytes=32 * 1024 * 1024,
            ),
            cost_estimate=cost,
        )(cls_src, gamma2, beta2, w_t, bias2)

    try:
        out = _run(True)
    except Exception:
        # Fallback for JAX builds where single-buffered pipeline_mode on an
        # invariant block is not supported; default double-buffering is used.
        out = _run(False)

    return out[:, :O] if O_p != O else out


def pooler_forward(x, gamma, beta, weight, bias, *, tile_b=None,
                   compute_dtype=jnp.bfloat16):
    """Convenience wrapper: prepares parameters per call (prefer preparing once)."""
    params = prepare_pooler_params(gamma, beta, weight, bias,
                                   compute_dtype=compute_dtype)
    return pooler_forward_prepared(x, params, tile_b=tile_b)


def pooler_reference(x, gamma, beta, weight, bias):
    """Pure-JAX reference mirroring the PyTorch forward (f32 math)."""
    cls_rep = x[:, 0, :].astype(jnp.float32)
    mean = jnp.mean(cls_rep, axis=-1, keepdims=True)
    var = jnp.mean((cls_rep - mean) ** 2, axis=-1, keepdims=True)
    normed = (cls_rep - mean) / jnp.sqrt(var + LN_EPS)
    normed = normed * gamma + beta
    out = jnp.tanh(normed @ weight.T + bias)
    return out.astype(x.dtype)


def _run_case(case_id, B, S, H, O, *, tile_b=None,
              compute_dtype=jnp.bfloat16, tol=3e-2):
    key = jax.random.fold_in(jax.random.PRNGKey(0), case_id)
    kx, kw, kb, kg, kbe = jax.random.split(key, 5)

    x = jax.random.normal(kx, (B, S, H), dtype=jnp.float32)
    gamma = 1.0 + 0.01 * jax.random.normal(kg, (H,), dtype=jnp.float32)
    beta = 0.01 * jax.random.normal(kbe, (H,), dtype=jnp.float32)
    weight = jax.random.normal(kw, (O, H), dtype=jnp.float32) / jnp.sqrt(float(H))
    bias = 0.01 * jax.random.normal(kb, (O,), dtype=jnp.float32)

    params = prepare_pooler_params(gamma, beta, weight, bias,
                                   compute_dtype=compute_dtype)
    out = jax.block_until_ready(pooler_forward_prepared(x, params, tile_b=tile_b))
    ref = pooler_reference(x, gamma, beta, weight, bias)
    assert out.shape == (B, O), (out.shape, (B, O))
    assert jnp.allclose(out, ref, atol=tol, rtol=tol), (
        f"mismatch (B={B}, S={S}, H={H}, O={O}, dtype={compute_dtype})"
    )


if __name__ == "__main__":
    # Small shapes consistent with the module (batch, seq, hidden) = (2, 8, 32).
    # f32 MXU path (tight tolerance), fallback CLS slice, lane-padded output:
    _run_case(0, B=2, S=8, H=32, O=32, compute_dtype=jnp.float32, tol=2e-5)
    # bf16 MXU (default), fused CLS gather via BlockSpec (lane-aligned H):
    _run_case(1, B=2, S=4, H=128, O=32)
    # Explicit batch tiling: 2 "parallel" grid steps, VMEM-resident weight:
    _run_case(2, B=16, S=8, H=32, O=32, tile_b=8)
    # Default tiling picks tile_b=16 -> 4 grid steps (pipelined / megacore):
    _run_case(3, B=64, S=4, H=128, O=256)
    print("KERNEL_OK")
</pallas_src>

<mosaic_0001>
module attributes {stable_mosaic.version = 11 : i64} {
  func.func @_pooler_kernel(%arg0: i32, %arg1: memref<2x32xf32, #tpu.memory_space<vmem>>, %arg2: memref<1x32xf32, #tpu.memory_space<vmem>>, %arg3: memref<1x32xf32, #tpu.memory_space<vmem>>, %arg4: memref<32x128xf32, #tpu.memory_space<vmem>>, %arg5: memref<1x128xf32, #tpu.memory_space<vmem>>, %arg6: memref<2x128xf32, #tpu.memory_space<vmem>>) attributes {dimension_semantics = [#tpu.dimension_semantics<parallel>], iteration_bounds = array<i64: 1>, scalar_prefetch = 0 : i64, scratch_operands = 0 : i64, tpu.core_type = #tpu.core_type<tc>, window_params = [{transform_indices = @transform_0, window_bounds = array<i64: 2, 32>}, {pipeline_mode = #tpu.pipeline_mode<synchronous>, transform_indices = @transform_1, window_bounds = array<i64: 1, 32>}, {pipeline_mode = #tpu.pipeline_mode<synchronous>, transform_indices = @transform_2, window_bounds = array<i64: 1, 32>}, {pipeline_mode = #tpu.pipeline_mode<synchronous>, transform_indices = @transform_3, window_bounds = array<i64: 32, 128>}, {pipeline_mode = #tpu.pipeline_mode<synchronous>, transform_indices = @transform_4, window_bounds = array<i64: 1, 128>}, {transform_indices = @transform_5, window_bounds = array<i64: 2, 128>}]} {
    %c0 = arith.constant 0 : index
    %c0_0 = arith.constant 0 : index
    %0 = vector.load %arg1[%c0, %c0_0] : memref<2x32xf32, #tpu.memory_space<vmem>>, vector<2x32xf32>
    %cst = arith.constant dense<0.000000e+00> : vector<2xf32>
    %1 = vector.multi_reduction <add>, %0, %cst [1] : vector<2x32xf32> to vector<2xf32>
    %2 = vector.shape_cast %1 : vector<2xf32> to vector<2x1xf32>
    %cst_1 = arith.constant 3.200000e+01 : f32
    %3 = vector.broadcast %cst_1 : f32 to vector<2x1xf32>
    %4 = arith.divf %2, %3 : vector<2x1xf32>
    %5 = vector.broadcast %4 : vector<2x1xf32> to vector<2x32xf32>
    %6 = arith.subf %0, %5 : vector<2x32xf32>
    %7 = arith.mulf %6, %6 : vector<2x32xf32>
    %cst_2 = arith.constant dense<0.000000e+00> : vector<2xf32>
    %8 = vector.multi_reduction <add>, %7, %cst_2 [1] : vector<2x32xf32> to vector<2xf32>
    %9 = vector.shape_cast %8 : vector<2xf32> to vector<2x1xf32>
    %cst_3 = arith.constant 3.200000e+01 : f32
    %10 = vector.broadcast %cst_3 : f32 to vector<2x1xf32>
    %11 = arith.divf %9, %10 : vector<2x1xf32>
    %cst_4 = arith.constant 9.99999974E-6 : f32
    %12 = vector.broadcast %cst_4 : f32 to vector<2x1xf32>
    %13 = arith.addf %11, %12 : vector<2x1xf32>
    %14 = math.rsqrt %13 : vector<2x1xf32>
    %15 = vector.broadcast %14 : vector<2x1xf32> to vector<2x32xf32>
    %16 = arith.mulf %6, %15 : vector<2x32xf32>
    %c0_5 = arith.constant 0 : index
    %c0_6 = arith.constant 0 : index
    %17 = vector.load %arg2[%c0_5, %c0_6] : memref<1x32xf32, #tpu.memory_space<vmem>>, vector<1x32xf32>
    %18 = vector.broadcast %17 : vector<1x32xf32> to vector<2x32xf32>
    %19 = arith.mulf %16, %18 : vector<2x32xf32>
    %c0_7 = arith.constant 0 : index
    %c0_8 = arith.constant 0 : index
    %20 = vector.load %arg3[%c0_7, %c0_8] : memref<1x32xf32, #tpu.memory_space<vmem>>, vector<1x32xf32>
    %21 = vector.broadcast %20 : vector<1x32xf32> to vector<2x32xf32>
    %22 = arith.addf %19, %21 : vector<2x32xf32>
    %c0_9 = arith.constant 0 : index
    %c0_10 = arith.constant 0 : index
    %23 = vector.load %arg4[%c0_9, %c0_10] : memref<32x128xf32, #tpu.memory_space<vmem>>, vector<32x128xf32>
    %cst_11 = arith.constant dense<0.000000e+00> : vector<2x128xf32>
    %24 = tpu.matmul %22, %23, %cst_11 {dimension_numbers = #tpu.dot_dimension_numbers<[1], [0], [0], [1], [0, 0, 1, 1], [], []>} : vector<2x32xf32>, vector<32x128xf32>, vector<2x128xf32> -> vector<2x128xf32>
    %c0_12 = arith.constant 0 : index
    %c0_13 = arith.constant 0 : index
    %25 = vector.load %arg5[%c0_12, %c0_13] : memref<1x128xf32, #tpu.memory_space<vmem>>, vector<1x128xf32>
    %26 = vector.broadcast %25 : vector<1x128xf32> to vector<2x128xf32>
    %27 = arith.addf %24, %26 : vector<2x128xf32>
    %28 = math.tanh %27 : vector<2x128xf32>
    %c0_14 = arith.constant 0 : index
    %c0_15 = arith.constant 0 : index
    %29 = vector.load %arg6[%c0_14, %c0_15] : memref<2x128xf32, #tpu.memory_space<vmem>>, vector<2x128xf32>
    tpu.vector_store %arg6[%c0_14, %c0_15], %28 {strides = array<i32>} : memref<2x128xf32, #tpu.memory_space<vmem>>, vector<2x128xf32>,
    return
  }
  func.func @transform_0(%arg0: i32) -> (i32, i32) {
    %c0_i32 = arith.constant 0 : i32
    %c0_i32_0 = arith.constant 0 : i32
    return %arg0, %c0_i32 : i32, i32
  }
  func.func @transform_1(%arg0: i32) -> (i32, i32) {
    %c0_i32 = arith.constant 0 : i32
    %c0_i32_0 = arith.constant 0 : i32
    %c0_i32_1 = arith.constant 0 : i32
    return %c0_i32, %c0_i32_0 : i32, i32
  }
  func.func @transform_2(%arg0: i32) -> (i32, i32) {
    %c0_i32 = arith.constant 0 : i32
    %c0_i32_0 = arith.constant 0 : i32
    %c0_i32_1 = arith.constant 0 : i32
    return %c0_i32, %c0_i32_0 : i32, i32
  }
  func.func @transform_3(%arg0: i32) -> (i32, i32) {
    %c0_i32 = arith.constant 0 : i32
    %c0_i32_0 = arith.constant 0 : i32
    %c0_i32_1 = arith.constant 0 : i32
    return %c0_i32, %c0_i32_0 : i32, i32
  }
  func.func @transform_4(%arg0: i32) -> (i32, i32) {
    %c0_i32 = arith.constant 0 : i32
    %c0_i32_0 = arith.constant 0 : i32
    %c0_i32_1 = arith.constant 0 : i32
    return %c0_i32, %c0_i32_0 : i32, i32
  }
  func.func @transform_5(%arg0: i32) -> (i32, i32) {
    %c0_i32 = arith.constant 0 : i32
    %c0_i32_0 = arith.constant 0 : i32
    return %arg0, %c0_i32 : i32, i32
  }
}

module attributes {stable_mosaic.version = 11 : i64} {
  func.func @_pooler_kernel(%arg0: i32, %arg1: memref<2x32xf32, #tpu.memory_space<vmem>>, %arg2: memref<1x32xf32, #tpu.memory_space<vmem>>, %arg3: memref<1x32xf32, #tpu.memory_space<vmem>>, %arg4: memref<32x128xf32, #tpu.memory_space<vmem>>, %arg5: memref<1x128xf32, #tpu.memory_space<vmem>>, %arg6: memref<2x128xf32, #tpu.memory_space<vmem>>) attributes {dimension_semantics = [#tpu.dimension_semantics<parallel>], iteration_bounds = array<i64: 1>, scalar_prefetch = 0 : i64, scratch_operands = 0 : i64, tpu.core_type = #tpu.core_type<tc>, window_params = [{transform_indices = @transform_0, window_bounds = array<i64: 2, 32>}, {pipeline_mode = #tpu.pipeline_mode<synchronous>, transform_indices = @transform_1, window_bounds = array<i64: 1, 32>}, {pipeline_mode = #tpu.pipeline_mode<synchronous>, transform_indices = @transform_2, window_bounds = array<i64: 1, 32>}, {pipeline_mode = #tpu.pipeline_mode<synchronous>, transform_indices = @transform_3, window_bounds = array<i64: 32, 128>}, {pipeline_mode = #tpu.pipeline_mode<synchronous>, transform_indices = @transform_4, window_bounds = array<i64: 1, 128>}, {transform_indices = @transform_5, window_bounds = array<i64: 2, 128>}]} {
    %c0 = arith.constant 0 : index
    %c0_0 = arith.constant 0 : index
    %0 = vector.load %arg1[%c0, %c0_0] : memref<2x32xf32, #tpu.memory_space<vmem>>, vector<2x32xf32>
    %cst = arith.constant dense<0.000000e+00> : vector<2xf32>
    %1 = vector.multi_reduction <add>, %0, %cst [1] : vector<2x32xf32> to vector<2xf32>
    %2 = vector.shape_cast %1 : vector<2xf32> to vector<2x1xf32>
    %cst_1 = arith.constant 3.200000e+01 : f32
    %3 = vector.broadcast %cst_1 : f32 to vector<2x1xf32>
    %4 = arith.divf %2, %3 : vector<2x1xf32>
    %5 = vector.broadcast %4 : vector<2x1xf32> to vector<2x32xf32>
    %6 = arith.subf %0, %5 : vector<2x32xf32>
    %7 = arith.mulf %6, %6 : vector<2x32xf32>
    %cst_2 = arith.constant dense<0.000000e+00> : vector<2xf32>
    %8 = vector.multi_reduction <add>, %7, %cst_2 [1] : vector<2x32xf32> to vector<2xf32>
    %9 = vector.shape_cast %8 : vector<2xf32> to vector<2x1xf32>
    %cst_3 = arith.constant 3.200000e+01 : f32
    %10 = vector.broadcast %cst_3 : f32 to vector<2x1xf32>
    %11 = arith.divf %9, %10 : vector<2x1xf32>
    %cst_4 = arith.constant 9.99999974E-6 : f32
    %12 = vector.broadcast %cst_4 : f32 to vector<2x1xf32>
    %13 = arith.addf %11, %12 : vector<2x1xf32>
    %14 = math.rsqrt %13 : vector<2x1xf32>
    %15 = vector.broadcast %14 : vector<2x1xf32> to vector<2x32xf32>
    %16 = arith.mulf %6, %15 : vector<2x32xf32>
    %c0_5 = arith.constant 0 : index
    %c0_6 = arith.constant 0 : index
    %17 = vector.load %arg2[%c0_5, %c0_6] : memref<1x32xf32, #tpu.memory_space<vmem>>, vector<1x32xf32>
    %18 = vector.broadcast %17 : vector<1x32xf32> to vector<2x32xf32>
    %19 = arith.mulf %16, %18 : vector<2x32xf32>
    %c0_7 = arith.constant 0 : index
    %c0_8 = arith.constant 0 : index
    %20 = vector.load %arg3[%c0_7, %c0_8] : memref<1x32xf32, #tpu.memory_space<vmem>>, vector<1x32xf32>
    %21 = vector.broadcast %20 : vector<1x32xf32> to vector<2x32xf32>
    %22 = arith.addf %19, %21 : vector<2x32xf32>
    %c0_9 = arith.constant 0 : index
    %c0_10 = arith.constant 0 : index
    %23 = vector.load %arg4[%c0_9, %c0_10] : memref<32x128xf32, #tpu.memory_space<vmem>>, vector<32x128xf32>
    %cst_11 = arith.constant dense<0.000000e+00> : vector<2x128xf32>
    %24 = tpu.matmul %22, %23, %cst_11 {dimension_numbers = #tpu.dot_dimension_numbers<[1], [0], [0], [1], [0, 0, 1, 1], [], []>} : vector<2x32xf32>, vector<32x128xf32>, vector<2x128xf32> -> vector<2x128xf32>
    %c0_12 = arith.constant 0 : index
    %c0_13 = arith.constant 0 : index
    %25 = vector.load %arg5[%c0_12, %c0_13] : memref<1x128xf32, #tpu.memory_space<vmem>>, vector<1x128xf32>
    %26 = vector.broadcast %25 : vector<1x128xf32> to vector<2x128xf32>
    %27 = arith.addf %24, %26 : vector<2x128xf32>
    %28 = math.tanh %27 : vector<2x128xf32>
    %c0_14 = arith.constant 0 : index
    %c0_15 = arith.constant 0 : index
    %29 = vector.load %arg6[%c0_14, %c0_15] : memref<2x128xf32, #tpu.memory_space<vmem>>, vector<2x128xf32>
    tpu.vector_store %arg6[%c0_14, %c0_15], %28 {strides = array<i32>} : memref<2x128xf32, #tpu.memory_space<vmem>>, vector<2x128xf32>,
    return
  }
  func.func @transform_0(%arg0: i32) -> (i32, i32) {
    %c0_i32 = arith.constant 0 : i32
    %c0_i32_0 = arith.constant 0 : i32
    return %arg0, %c0_i32 : i32, i32
  }
  func.func @transform_1(%arg0: i32) -> (i32, i32) {
    %c0_i32 = arith.constant 0 : i32
    %c0_i32_0 = arith.constant 0 : i32
    %c0_i32_1 = arith.constant 0 : i32
    return %c0_i32, %c0_i32_0 : i32, i32
  }
  func.func @transform_2(%arg0: i32) -> (i32, i32) {
    %c0_i32 = arith.constant 0 : i32
    %c0_i32_0 = arith.constant 0 : i32
    %c0_i32_1 = arith.constant 0 : i32
    return %c0_i32, %c0_i32_0 : i32, i32
  }
  func.func @transform_3(%arg0: i32) -> (i32, i32) {
    %c0_i32 = arith.constant 0 : i32
    %c0_i32_0 = arith.constant 0 : i32
    %c0_i32_1 = arith.constant 0 : i32
    return %c0_i32, %c0_i32_0 : i32, i32
  }
  func.func @transform_4(%arg0: i32) -> (i32, i32) {
    %c0_i32 = arith.constant 0 : i32
    %c0_i32_0 = arith.constant 0 : i32
    %c0_i32_1 = arith.constant 0 : i32
    return %c0_i32, %c0_i32_0 : i32, i32
  }
  func.func @transform_5(%arg0: i32) -> (i32, i32) {
    %c0_i32 = arith.constant 0 : i32
    %c0_i32_0 = arith.constant 0 : i32
    return %arg0, %c0_i32 : i32, i32
  }
}

</mosaic_0001>

<llo_original>
// kernel: tpu_custom_call.1
$region0: #{tpu_custom_call.1}
  #allocation0 [shape = 'u32[]', space=smem, size = 0x4, offset = 0x4, fixed_abs, tag = 'smem constant byte address 0x4 - core index']
  #allocation1 [shape = 'u32[72,128]{1,0:T(1,128)}', space=vmem, size = 0x9000, scoped, tag = 'internal scratch']
  %s0 = inlined_call_operand.hbm [shape: f32[2,32], index: 0, kind: input, shape index: {}]
  %s1 = inlined_call_operand.hbm [shape: f32[1,32], index: 1, kind: input, shape index: {}]
  %s2 = inlined_call_operand.vmem [shape: f32[1,32], index: 2, kind: input, shape index: {}]
  %s3 = inlined_call_operand.hbm [shape: f32[32,128], index: 3, kind: input, shape index: {}]
  %s4 = inlined_call_operand.vmem [shape: f32[1,128], index: 4, kind: input, shape index: {}]
  %s5 = inlined_call_operand.hbm [shape: f32[2,128], index: 5, kind: output, shape index: {}]
  %s6 = sld [smem:[#allocation0]]
  $region42: #{tpu_custom_call.1} parent=0
    _
  %s8 = ssub.s32 1, %s6
  %s9 = scalar_select 0, %s8, %s6
  $region1: #{tpu_custom_call.1} parent=0
    #allocation2 [shape = 'u8[1024]{0}', space=vmem, size = 0x400, scoped, tag = 'input window, operand 0, single buffered']
    #allocation3 [shape = 's32[1]{0}', space=sflag, size = 0x4, scoped, tag = 'scoped memory for tpu_custom_call.1']
    #allocation4 [shape = 's32[1]{0}', space=sflag, size = 0x4, scoped, tag = 'scoped memory for tpu_custom_call.1']
    #allocation5 [shape = 'u8[512]{0}', space=vmem, size = 0x400, scoped, tag = 'input window, operand 1, single buffered']
    #allocation6 [shape = 's32[1]{0}', space=sflag, size = 0x4, scoped, tag = 'scoped memory for tpu_custom_call.1']
    #allocation7 [shape = 'u8[16384]{0}', space=vmem, size = 0x4000, scoped, tag = 'input window, operand 3, single buffered']
    #allocation8 [shape = 'u8[1024]{0}', space=vmem, size = 0x400, scoped, tag = 'output window, operand 0, single buffered']
    %10 = vsyncpa [#allocation3], 0
    %11 = vsyncpa [#allocation6], 0
    %12 = vsyncpa [#allocation4], 0
    // Predicated region
    $region2: #{tpu_custom_call.1} parent=1 // pred_check
      _
    $region3: #{tpu_custom_call.1} parent=1 // pred_check_branch
      %14 = sbr.rel (0) target = $region5
    $region4: #{tpu_custom_call.1} parent=1 // pred_region
      %16 = vsyncadd [#allocation3], 0
      %s18 = sshll.u32 %s0, 4
      %s19 = int_to_ptr.hbm [resolvable:$true] %s18
      %s20 = sshll.u32 [#allocation2], 4
      %s21 = int_to_ptr.vmem [resolvable:$true] %s20
      %23 = dma.hbm_to_vmem [thread:$0]  %s19, 32, %s21, [#allocation3]
    $region5: #{tpu_custom_call.1} parent=1 // pred_fallthru
      _
    // Predicated region
    $region6: #{tpu_custom_call.1} parent=1 // pred_check
      _
    $region7: #{tpu_custom_call.1} parent=1 // pred_check_branch
      %25 = sbr.rel (0) target = $region9
    $region8: #{tpu_custom_call.1} parent=1 // pred_region
      %27 = vsyncadd [#allocation6], 0
      %s29 = sshll.u32 %s1, 4
      %s30 = int_to_ptr.hbm [resolvable:$true] %s29
      %s31 = sshll.u32 [#allocation5], 4
      %s32 = int_to_ptr.vmem [resolvable:$true] %s31
      %34 = dma.hbm_to_vmem [thread:$0]  %s30, 16, %s32, [#allocation6]
    $region9: #{tpu_custom_call.1} parent=1 // pred_fallthru
      _
    // Predicated region
    $region10: #{tpu_custom_call.1} parent=1 // pred_check
      _
    $region11: #{tpu_custom_call.1} parent=1 // pred_check_branch
      %36 = sbr.rel (0) target = $region13
    $region12: #{tpu_custom_call.1} parent=1 // pred_region
      _
    $region13: #{tpu_custom_call.1} parent=1 // pred_fallthru
      _
    // Predicated region
    $region14: #{tpu_custom_call.1} parent=1 // pred_check
      _
    $region15: #{tpu_custom_call.1} parent=1 // pred_check_branch
      %38 = sbr.rel (0) target = $region17
    $region16: #{tpu_custom_call.1} parent=1 // pred_region
      %40 = vsyncadd [#allocation6], 0
      %s41 = sshll.u32 %s3, 4
      %s42 = int_to_ptr.hbm [resolvable:$true] %s41
      %s43 = sshll.u32 [#allocation7], 4
      %s44 = int_to_ptr.vmem [resolvable:$true] %s43
      %49 = dma.hbm_to_vmem [thread:$0]  %s42, 512, %s44, [#allocation6], 128, 128, 8
    $region17: #{tpu_custom_call.1} parent=1 // pred_fallthru
      _
    // Predicated region
    $region18: #{tpu_custom_call.1} parent=1 // pred_check
      _
    $region19: #{tpu_custom_call.1} parent=1 // pred_check_branch
      %51 = sbr.rel (0) target = $region21
    $region20: #{tpu_custom_call.1} parent=1 // pred_region
      _
    $region21: #{tpu_custom_call.1} parent=1 // pred_fallthru
      _
    // Predicated region
    $region22: #{tpu_custom_call.1} parent=1 // pred_check
      _
    $region23: #{tpu_custom_call.1} parent=1 // pred_check_branch
      %53 = sbr.rel (0) target = $region25
    $region24: #{tpu_custom_call.1} parent=1 // pred_region
      %55 = dma.done [#allocation3], 32
    $region25: #{tpu_custom_call.1} parent=1 // pred_fallthru
      _
    // Predicated region
    $region26: #{tpu_custom_call.1} parent=1 // pred_check
      _
    $region27: #{tpu_custom_call.1} parent=1 // pred_check_branch
      %57 = sbr.rel (0) target = $region29
    $region28: #{tpu_custom_call.1} parent=1 // pred_region
      %59 = dma.done [#allocation6], 16
    $region29: #{tpu_custom_call.1} parent=1 // pred_fallthru
      _
    // Predicated region
    $region30: #{tpu_custom_call.1} parent=1 // pred_check
      _
    $region31: #{tpu_custom_call.1} parent=1 // pred_check_branch
      %61 = sbr.rel (0) target = $region33
    $region32: #{tpu_custom_call.1} parent=1 // pred_region
      %63 = dma.done [#allocation6], 512
    $region33: #{tpu_custom_call.1} parent=1 // pred_fallthru
      _
    %v64 = vld [vmem:[#allocation2] sm:$0x3]
    %vm65 = vcmask 254976
    %v66 = vsel %vm65, %v64, 0.0
    %67 = vadd.xlane.f32.xlu0 %v66
    %v68 = vpop.xlane.xlu0 %67
    %v69 = vrcp.pop 32.0
    %v70 = vmul.f32 32.0, %v69
    %v71 = vsub.f32 1.0, %v70
    %v72 = vmul.f32 %v69, %v71
    %v73 = vadd.f32 %v69, %v72
    %vm74 = vweird.f32 %v69
    %v75 = vsel %vm74, %v69, %v73
    %v76 = vmul.f32 %v68, %v75
    %v77 = vsub.f32 %v64, %v76
    %v78 = vmul.f32 %v77, %v77
    %v79 = vsel %vm65, %v78, 0.0
    %80 = vadd.xlane.f32.xlu0 %v79
    %v81 = vpop.xlane.xlu0 %80
    %v82 = vmul.f32 %v81, %v75
    %v83 = vadd.f32 %v82, 1e-05
    %v84 = vrsqrt.pop %v83
    %v85 = vmul.f32 %v84, %v83
    %v86 = vmul.f32 %v85, %v84
    %v87 = vmul.f32 0.5, %v86
    %v88 = vsub.f32 1.5, %v87
    %v89 = vmul.f32 %v84, %v88
    %vm90 = vweird.f32 %v83
    %vm91 = vweird.f32 %v84
    %vm92 = vmor %vm90, %vm91
    %v93 = vsel %vm92, %v84, %v89
    %v94 = vmul.f32 %v77, %v93
    %v95 = vld [vmem:[#allocation5] sm:$0x1]
    %v97 = vperm.slane %v95, 0
    %v99 = vmul.f32 %v94, %v97
    %v100 = vld [vmem:[%s2] sm:$0x1]
    %v102 = vperm.slane %v100, 0
    %v104 = vadd.f32 %v99, %v102
    %v105 = vld [vmem:[#allocation7] sm:$0xff]
    %v106 = vld [vmem:[#allocation7 + $0x8] sm:$0xff]
    %v107 = vld [vmem:[#allocation7 + $0x10] sm:$0xff]
    %v108 = vld [vmem:[#allocation7 + $0x18] sm:$0xff]
    %v109 = vld [vmem:[%s4] sm:$0x1]
    %v111 = vperm.slane %v109, 0
    %vm113 = vcmask 261120
    %v115 = vsel %vm113, %v104, 0
    %117 = vmatpush.msra.mxu0 0.0
    %118 = vmatpush.msra.mxu0 0.0
    %119 = vmatpush.msra.mxu0 0.0
    %120 = vmatpush.msra.mxu0 0.0
    %121 = vmatpush.msra.mxu0 0.0
    %122 = vmatpush.msra.mxu0 0.0
    %123 = vmatpush.msra.mxu0 0.0
    %124 = vmatpush.msra.mxu0 0.0
    %125 = vmatpush.msra.mxu0 0.0
    %126 = vmatpush.msra.mxu0 0.0
    %127 = vmatpush.msra.mxu0 0.0
    %128 = vmatpush.msra.mxu0 0.0
    %129 = vmatpush.msra.mxu0 %v108
    %130 = vmatpush.msra.mxu0 %v107
    %131 = vmatpush.msra.mxu0 %v106
    %132 = vmatpush.msra.mxu0 %v105
    %133 = vmatmul.f32.gmra.mxu0 %v115
    %v134 = vpop.f32.mrf.mxu0
    %v135 = vadd.f32 %v111, %v134
    %136 = vdwg.mxu0
    %v137 = vtanh.pop %v135
    %138 = vst [vmem:[#allocation8] sm:$0x3] %v137
    // Predicated region
    $region34: #{tpu_custom_call.1} parent=1 // pred_check
      _
    $region35: #{tpu_custom_call.1} parent=1 // pred_check_branch
      %140 = sbr.rel (0) target = $region37
    $region36: #{tpu_custom_call.1} parent=1 // pred_region
      %142 = vsyncadd [#allocation4], 0
      %s144 = sshll.u32 [#allocation8], 4
      %s145 = int_to_ptr.vmem [resolvable:$true] %s144
      %s146 = sshll.u32 %s5, 4
      %s147 = int_to_ptr.hbm [resolvable:$true] %s146
      %149 = dma.vmem_to_hbm [thread:$0]  %s145, 32, %s147, [#allocation4]
    $region37: #{tpu_custom_call.1} parent=1 // pred_fallthru
      _
    // Predicated region
    $region38: #{tpu_custom_call.1} parent=1 // pred_check
      _
    $region39: #{tpu_custom_call.1} parent=1 // pred_check_branch
      %151 = sbr.rel (0) target = $region41
    $region40: #{tpu_custom_call.1} parent=1 // pred_region
      %153 = dma.done [#allocation4], 32
    $region41: #{tpu_custom_call.1} parent=1 // pred_fallthru
      _
    %154 = vsyncpa [#allocation3], 1
    %155 = vsyncpa [#allocation6], 1
    %156 = vsyncpa [#allocation4], 1

// kernel: tpu_custom_call.1
$region0: #{tpu_custom_call.1}
  #allocation0 [shape = 'u32[]', space=smem, size = 0x4, offset = 0x4, fixed_abs, tag = 'smem constant byte address 0x4 - core index']
  #allocation1 [shape = 'u32[72,128]{1,0:T(1,128)}', space=vmem, size = 0x9000, scoped, tag = 'internal scratch']
  %s0 = inlined_call_operand.hbm [shape: f32[2,32], index: 0, kind: input, shape index: {}]
  %s1 = inlined_call_operand.hbm [shape: f32[1,32], index: 1, kind: input, shape index: {}]
  %s2 = inlined_call_operand.vmem [shape: f32[1,32], index: 2, kind: input, shape index: {}]
  %s3 = inlined_call_operand.hbm [shape: f32[32,128], index: 3, kind: input, shape index: {}]
  %s4 = inlined_call_operand.vmem [shape: f32[1,128], index: 4, kind: input, shape index: {}]
  %s5 = inlined_call_operand.hbm [shape: f32[2,128], index: 5, kind: output, shape index: {}]
  %s6 = sld [smem:[#allocation0]]
  $region42: #{tpu_custom_call.1} parent=0
    _
  %s8 = ssub.s32 1, %s6
  %s9 = scalar_select 0, %s8, %s6
  $region1: #{tpu_custom_call.1} parent=0
    #allocation2 [shape = 'u8[1024]{0}', space=vmem, size = 0x400, scoped, tag = 'input window, operand 0, single buffered']
    #allocation3 [shape = 's32[1]{0}', space=sflag, size = 0x4, scoped, tag = 'scoped memory for tpu_custom_call.1']
    #allocation4 [shape = 's32[1]{0}', space=sflag, size = 0x4, scoped, tag = 'scoped memory for tpu_custom_call.1']
    #allocation5 [shape = 'u8[512]{0}', space=vmem, size = 0x400, scoped, tag = 'input window, operand 1, single buffered']
    #allocation6 [shape = 's32[1]{0}', space=sflag, size = 0x4, scoped, tag = 'scoped memory for tpu_custom_call.1']
    #allocation7 [shape = 'u8[16384]{0}', space=vmem, size = 0x4000, scoped, tag = 'input window, operand 3, single buffered']
    #allocation8 [shape = 'u8[1024]{0}', space=vmem, size = 0x400, scoped, tag = 'output window, operand 0, single buffered']
    %10 = vsyncpa [#allocation3], 0
    %11 = vsyncpa [#allocation6], 0
    %12 = vsyncpa [#allocation4], 0
    // Predicated region
    $region2: #{tpu_custom_call.1} parent=1 // pred_check
      _
    $region3: #{tpu_custom_call.1} parent=1 // pred_check_branch
      %14 = sbr.rel (0) target = $region5
    $region4: #{tpu_custom_call.1} parent=1 // pred_region
      %16 = vsyncadd [#allocation3], 0
      %s18 = sshll.u32 %s0, 4
      %s19 = int_to_ptr.hbm [resolvable:$true] %s18
      %s20 = sshll.u32 [#allocation2], 4
      %s21 = int_to_ptr.vmem [resolvable:$true] %s20
      %23 = dma.hbm_to_vmem [thread:$0]  %s19, 32, %s21, [#allocation3]
    $region5: #{tpu_custom_call.1} parent=1 // pred_fallthru
      _
    // Predicated region
    $region6: #{tpu_custom_call.1} parent=1 // pred_check
      _
    $region7: #{tpu_custom_call.1} parent=1 // pred_check_branch
      %25 = sbr.rel (0) target = $region9
    $region8: #{tpu_custom_call.1} parent=1 // pred_region
      %27 = vsyncadd [#allocation6], 0
      %s29 = sshll.u32 %s1, 4
      %s30 = int_to_ptr.hbm [resolvable:$true] %s29
      %s31 = sshll.u32 [#allocation5], 4
      %s32 = int_to_ptr.vmem [resolvable:$true] %s31
      %34 = dma.hbm_to_vmem [thread:$0]  %s30, 16, %s32, [#allocation6]
    $region9: #{tpu_custom_call.1} parent=1 // pred_fallthru
      _
    // Predicated region
    $region10: #{tpu_custom_call.1} parent=1 // pred_check
      _
    $region11: #{tpu_custom_call.1} parent=1 // pred_check_branch
      %36 = sbr.rel (0) target = $region13
    $region12: #{tpu_custom_call.1} parent=1 // pred_region
      _
    $region13: #{tpu_custom_call.1} parent=1 // pred_fallthru
      _
    // Predicated region
    $region14: #{tpu_custom_call.1} parent=1 // pred_check
      _
    $region15: #{tpu_custom_call.1} parent=1 // pred_check_branch
      %38 = sbr.rel (0) target = $region17
    $region16: #{tpu_custom_call.1} parent=1 // pred_region
      %40 = vsyncadd [#allocation6], 0
      %s41 = sshll.u32 %s3, 4
      %s42 = int_to_ptr.hbm [resolvable:$true] %s41
      %s43 = sshll.u32 [#allocation7], 4
      %s44 = int_to_ptr.vmem [resolvable:$true] %s43
      %49 = dma.hbm_to_vmem [thread:$0]  %s42, 512, %s44, [#allocation6], 128, 128, 8
    $region17: #{tpu_custom_call.1} parent=1 // pred_fallthru
      _
    // Predicated region
    $region18: #{tpu_custom_call.1} parent=1 // pred_check
      _
    $region19: #{tpu_custom_call.1} parent=1 // pred_check_branch
      %51 = sbr.rel (0) target = $region21
    $region20: #{tpu_custom_call.1} parent=1 // pred_region
      _
    $region21: #{tpu_custom_call.1} parent=1 // pred_fallthru
      _
    // Predicated region
    $region22: #{tpu_custom_call.1} parent=1 // pred_check
      _
    $region23: #{tpu_custom_call.1} parent=1 // pred_check_branch
      %53 = sbr.rel (0) target = $region25
    $region24: #{tpu_custom_call.1} parent=1 // pred_region
      %55 = dma.done [#allocation3], 32
    $region25: #{tpu_custom_call.1} parent=1 // pred_fallthru
      _
    // Predicated region
    $region26: #{tpu_custom_call.1} parent=1 // pred_check
      _
    $region27: #{tpu_custom_call.1} parent=1 // pred_check_branch
      %57 = sbr.rel (0) target = $region29
    $region28: #{tpu_custom_call.1} parent=1 // pred_region
      %59 = dma.done [#allocation6], 16
    $region29: #{tpu_custom_call.1} parent=1 // pred_fallthru
      _
    // Predicated region
    $region30: #{tpu_custom_call.1} parent=1 // pred_check
      _
    $region31: #{tpu_custom_call.1} parent=1 // pred_check_branch
      %61 = sbr.rel (0) target = $region33
    $region32: #{tpu_custom_call.1} parent=1 // pred_region
      %63 = dma.done [#allocation6], 512
    $region33: #{tpu_custom_call.1} parent=1 // pred_fallthru
      _
    %v64 = vld [vmem:[#allocation2] sm:$0x3]
    %vm65 = vcmask 254976
    %v66 = vsel %vm65, %v64, 0.0
    %67 = vadd.xlane.f32.xlu0 %v66
    %v68 = vpop.xlane.xlu0 %67
    %v69 = vrcp.pop 32.0
    %v70 = vmul.f32 32.0, %v69
    %v71 = vsub.f32 1.0, %v70
    %v72 = vmul.f32 %v69, %v71
    %v73 = vadd.f32 %v69, %v72
    %vm74 = vweird.f32 %v69
    %v75 = vsel %vm74, %v69, %v73
    %v76 = vmul.f32 %v68, %v75
    %v77 = vsub.f32 %v64, %v76
    %v78 = vmul.f32 %v77, %v77
    %v79 = vsel %vm65, %v78, 0.0
    %80 = vadd.xlane.f32.xlu0 %v79
    %v81 = vpop.xlane.xlu0 %80
    %v82 = vmul.f32 %v81, %v75
    %v83 = vadd.f32 %v82, 1e-05
    %v84 = vrsqrt.pop %v83
    %v85 = vmul.f32 %v84, %v83
    %v86 = vmul.f32 %v85, %v84
    %v87 = vmul.f32 0.5, %v86
    %v88 = vsub.f32 1.5, %v87
    %v89 = vmul.f32 %v84, %v88
    %vm90 = vweird.f32 %v83
    %vm91 = vweird.f32 %v84
    %vm92 = vmor %vm90, %vm91
    %v93 = vsel %vm92, %v84, %v89
    %v94 = vmul.f32 %v77, %v93
    %v95 = vld [vmem:[#allocation5] sm:$0x1]
    %v97 = vperm.slane %v95, 0
    %v99 = vmul.f32 %v94, %v97
    %v100 = vld [vmem:[%s2] sm:$0x1]
    %v102 = vperm.slane %v100, 0
    %v104 = vadd.f32 %v99, %v102
    %v105 = vld [vmem:[#allocation7] sm:$0xff]
    %v106 = vld [vmem:[#allocation7 + $0x8] sm:$0xff]
    %v107 = vld [vmem:[#allocation7 + $0x10] sm:$0xff]
    %v108 = vld [vmem:[#allocation7 + $0x18] sm:$0xff]
    %v109 = vld [vmem:[%s4] sm:$0x1]
    %v111 = vperm.slane %v109, 0
    %vm113 = vcmask 261120
    %v115 = vsel %vm113, %v104, 0
    %117 = vmatpush.msra.mxu0 0.0
    %118 = vmatpush.msra.mxu0 0.0
    %119 = vmatpush.msra.mxu0 0.0
    %120 = vmatpush.msra.mxu0 0.0
    %121 = vmatpush.msra.mxu0 0.0
    %122 = vmatpush.msra.mxu0 0.0
    %123 = vmatpush.msra.mxu0 0.0
    %124 = vmatpush.msra.mxu0 0.0
    %125 = vmatpush.msra.mxu0 0.0
    %126 = vmatpush.msra.mxu0 0.0
    %127 = vmatpush.msra.mxu0 0.0
    %128 = vmatpush.msra.mxu0 0.0
    %129 = vmatpush.msra.mxu0 %v108
    %130 = vmatpush.msra.mxu0 %v107
    %131 = vmatpush.msra.mxu0 %v106
    %132 = vmatpush.msra.mxu0 %v105
    %133 = vmatmul.f32.gmra.mxu0 %v115
    %v134 = vpop.f32.mrf.mxu0
    %v135 = vadd.f32 %v111, %v134
    %136 = vdwg.mxu0
    %v137 = vtanh.pop %v135
    %138 = vst [vmem:[#allocation8] sm:$0x3] %v137
    // Predicated region
    $region34: #{tpu_custom_call.1} parent=1 // pred_check
      _
    $region35: #{tpu_custom_call.1} parent=1 // pred_check_branch
      %140 = sbr.rel (0) target = $region37
    $region36: #{tpu_custom_call.1} parent=1 // pred_region
      %142 = vsyncadd [#allocation4], 0
      %s144 = sshll.u32 [#allocation8], 4
      %s145 = int_to_ptr.vmem [resolvable:$true] %s144
      %s146 = sshll.u32 %s5, 4
      %s147 = int_to_ptr.hbm [resolvable:$true] %s146
      %149 = dma.vmem_to_hbm [thread:$0]  %s145, 32, %s147, [#allocation4]
    $region37: #{tpu_custom_call.1} parent=1 // pred_fallthru
      _
    // Predicated region
    $region38: #{tpu_custom_call.1} parent=1 // pred_check
      _
    $region39: #{tpu_custom_call.1} parent=1 // pred_check_branch
      %151 = sbr.rel (0) target = $region41
    $region40: #{tpu_custom_call.1} parent=1 // pred_region
      %153 = dma.done [#allocation4], 32
    $region41: #{tpu_custom_call.1} parent=1 // pred_fallthru
      _
    %154 = vsyncpa [#allocation3], 1
    %155 = vsyncpa [#allocation6], 1
    %156 = vsyncpa [#allocation4], 1

</llo_original>
